<compile_context>
chip_gen: v6e
topology: v6e:2x2x1
jax: 0.10.0
libtpu: 0.0.40
codegen_flags: <defaults>
</compile_context>

<pallas_src>
import functools

import jax
import jax.numpy as jnp
from jax.experimental import pallas as pl
from jax.experimental.pallas import tpu as pltpu


def _soft_dice_kernel(logits_ref, targets_ref, out_ref, inter_ref, tsum_ref, *,
                      epsilon, pred_sum, num_classes):
    """Grid = (num_classes, num_lane_tiles); class outer, lane-tile (reduction) inner.

    logits_ref : (H, TL) f32  -- lane-dense tile of class c's logits
    targets_ref: (H, TL) int  -- label tile (padded columns hold -1)
    out_ref    : (1, 1)  f32  -- mean-dice accumulator (resident across the grid)
    inter_ref  : (1, 1)  f32  -- running sum(pred * target) for the current class
    tsum_ref   : (1, 1)  f32  -- running sum(target) for the current class
    """
    c = pl.program_id(0)
    t = pl.program_id(1)
    num_t = pl.num_programs(1)

    x = logits_ref[...]                                 # (H, TL) float32
    # Softmax over H without materializing predicted = e / colsum.
    m = jnp.max(x, axis=0, keepdims=True)               # (1, TL)
    e = jnp.exp(x - m)                                  # (H, TL)
    colsum = jnp.sum(e, axis=0, keepdims=True)          # (1, TL)

    tgt = targets_ref[...].astype(jnp.int32)            # widen (int8 in HBM)
    mask = tgt == c                                     # (H, TL); pad cols (-1) never match
    num = jnp.sum(jnp.where(mask, e, 0.0), axis=0, keepdims=True)   # (1, TL)

    # sum(pred * target) over this tile == sum_cols(num / colsum): divide only (1, TL).
    inter_partial = jnp.sum(num / colsum)
    tsum_partial = jnp.sum(mask.astype(jnp.float32))

    @pl.when(t == 0)
    def _init_class_accumulators():
        inter_ref[...] = jnp.zeros_like(inter_ref)
        tsum_ref[...] = jnp.zeros_like(tsum_ref)

    inter_ref[...] += inter_partial
    tsum_ref[...] += tsum_partial

    last_t = t == num_t - 1

    @pl.when(last_t & (c == 0))
    def _zero_output():
        out_ref[...] = jnp.zeros_like(out_ref)

    @pl.when(last_t)
    def _accumulate_dice():
        inter = inter_ref[...]                           # (1, 1)
        union = pred_sum + tsum_ref[...]                 # sum(pred) == N*W analytically
        dice = 1.0 - (2.0 * inter + epsilon) / (union + epsilon)
        out_ref[...] += dice

    @pl.when(last_t & (c == num_classes - 1))
    def _finalize():
        out_ref[...] = out_ref[...] / num_classes


def soft_dice_loss(logits, targets, epsilon=1e-06):
    """logits: (N, C, H, W) float32 (NCHW); targets: (N, H, W) integer class labels."""
    N, C, H, W = logits.shape
    NW = N * W

    # Lane-dense layout: (N,C,H,W) -> (C,H,N*W); softmax axis H on sublanes,
    # fused N*W on lanes, per-class slab contiguous in HBM.
    logits_r = jnp.transpose(logits.astype(jnp.float32), (1, 2, 0, 3)).reshape(C, H, NW)
    tgt_dtype = jnp.int8 if C <= 127 else jnp.int32
    targets_r = jnp.transpose(targets.astype(tgt_dtype), (1, 0, 2)).reshape(H, NW)

    # Lane tiling keeps VMEM bounded on all chips; the softmax axis H stays whole.
    per_block_budget = 2 * 1024 * 1024                      # ~2 MiB f32 logits block
    max_lanes_by_budget = max(128, ((per_block_budget // (4 * H)) // 128) * 128)
    if NW <= max_lanes_by_budget:
        lane_tile = NW                                      # single full-width tile
    else:
        lane_tile = int(min(2048, max_lanes_by_budget))     # multiple of 128

    nw_pad = -(-NW // lane_tile) * lane_tile
    if nw_pad != NW:
        logits_r = jnp.pad(logits_r, ((0, 0), (0, 0), (0, nw_pad - NW)))
        # pad label -1 never matches any class -> padded columns contribute nothing
        targets_r = jnp.pad(targets_r, ((0, 0), (0, nw_pad - NW)), constant_values=-1)
    num_tiles = nw_pad // lane_tile

    kernel = functools.partial(
        _soft_dice_kernel,
        epsilon=float(epsilon),
        pred_sum=float(NW),      # each softmax column sums to 1 -> sum(pred) == N*W
        num_classes=C,
    )

    out = pl.pallas_call(
        kernel,
        out_shape=jax.ShapeDtypeStruct((1, 1), jnp.float32),
        grid_spec=pltpu.PrefetchScalarGridSpec(
            num_scalar_prefetch=0,
            grid=(C, num_tiles),                      # class outer, lane-tile reduction inner
            in_specs=[
                # per-class, per-lane-tile logits slab; class dim squeezed away
                pl.BlockSpec((pl.Squeezed(), H, lane_tile), lambda c, t: (c, 0, t)),
                # label tile (int8); constant across classes when num_tiles == 1
                pl.BlockSpec((H, lane_tile), lambda c, t: (0, t)),
            ],
            out_specs=pl.BlockSpec((1, 1), lambda c, t: (0, 0)),
            scratch_shapes=[
                pltpu.VMEM((1, 1), jnp.float32),      # per-class intersection accumulator
                pltpu.VMEM((1, 1), jnp.float32),      # per-class target-count accumulator
            ],
        ),
        compiler_params=pltpu.CompilerParams(
            # single (1,1) accumulator output is revisited across both grid axes
            dimension_semantics=("arbitrary", "arbitrary"),
            vmem_limit_bytes=32 * 1024 * 1024,
        ),
    )(logits_r, targets_r)
    return out[0, 0]


def _reference_soft_dice_loss(logits, targets, epsilon=1e-06):
    """Pure-JAX reference matching the PyTorch module exactly."""
    num_classes = logits.shape[1]
    dice = 0.0
    for i in range(num_classes):
        predicted = jax.nn.softmax(logits[:, i, :, :], axis=1)
        target = (targets == i).astype(jnp.float32)
        intersection = jnp.sum(predicted * target)
        union = jnp.sum(predicted) + jnp.sum(target)
        dice += 1.0 - (2.0 * intersection + epsilon) / (union + epsilon)
    return dice / num_classes


if __name__ == "__main__":
    key = jax.random.PRNGKey(0)
    k1, k2 = jax.random.split(key)

    N, C, H, W = 2, 4, 16, 16
    logits = jax.random.normal(k1, (N, C, H, W), dtype=jnp.float32)
    targets = jax.random.randint(k2, (N, H, W), 0, C, dtype=jnp.int32)

    loss = soft_dice_loss(logits, targets)
    jax.block_until_ready(loss)

    ref = _reference_soft_dice_loss(logits, targets)
    assert jnp.allclose(loss, ref, rtol=1e-5, atol=1e-6), (loss, ref)

    print("KERNEL_OK")
</pallas_src>

<mosaic_0001>
module attributes {stable_mosaic.version = 11 : i64} {
  func.func @_soft_dice_kernel(%arg0: i32, %arg1: i32, %arg2: memref<1x16x32xf32, #tpu.memory_space<vmem>>, %arg3: memref<16x32xi8, #tpu.memory_space<vmem>>, %arg4: memref<1x1xf32, #tpu.memory_space<vmem>>, %arg5: memref<1x1xf32, #tpu.memory_space<vmem>>, %arg6: memref<1x1xf32, #tpu.memory_space<vmem>>) attributes {dimension_semantics = [#tpu.dimension_semantics<arbitrary>, #tpu.dimension_semantics<arbitrary>], iteration_bounds = array<i64: 4, 1>, scalar_prefetch = 0 : i64, scratch_operands = 2 : i64, tpu.core_type = #tpu.core_type<tc>, window_params = [{transform_indices = @transform_0, window_bounds = array<i64: 1, 16, 32>}, {transform_indices = @transform_1, window_bounds = array<i64: 16, 32>}, {pipeline_mode = #tpu.pipeline_mode<synchronous>, transform_indices = @transform_2, window_bounds = array<i64: 1, 1>}]} {
    %c0 = arith.constant 0 : index
    %c0_0 = arith.constant 0 : index
    %c0_1 = arith.constant 0 : index
    %0 = vector.load %arg2[%c0, %c0_0, %c0_1] : memref<1x16x32xf32, #tpu.memory_space<vmem>>, vector<1x16x32xf32>
    %1 = vector.shape_cast %0 : vector<1x16x32xf32> to vector<16x32xf32>
    %cst = arith.constant dense<0xFF800000> : vector<32xf32>
    %2 = vector.multi_reduction <maximumf>, %1, %cst [0] : vector<16x32xf32> to vector<32xf32>
    %3 = vector.shape_cast %2 : vector<32xf32> to vector<1x32xf32>
    %4 = vector.broadcast %3 : vector<1x32xf32> to vector<16x32xf32>
    %5 = arith.subf %1, %4 : vector<16x32xf32>
    %6 = math.exp %5 : vector<16x32xf32>
    %cst_2 = arith.constant dense<0.000000e+00> : vector<32xf32>
    %7 = vector.multi_reduction <add>, %6, %cst_2 [0] : vector<16x32xf32> to vector<32xf32>
    %8 = vector.shape_cast %7 : vector<32xf32> to vector<1x32xf32>
    %c0_3 = arith.constant 0 : index
    %c0_4 = arith.constant 0 : index
    %9 = vector.load %arg3[%c0_3, %c0_4] : memref<16x32xi8, #tpu.memory_space<vmem>>, vector<16x32xi8>
    %10 = arith.extsi %9 : vector<16x32xi8> to vector<16x32xi32>
    %11 = vector.broadcast %arg0 : i32 to vector<16x32xi32>
    %12 = arith.cmpi eq, %10, %11 : vector<16x32xi32>
    %cst_5 = arith.constant 0.000000e+00 : f32
    %13 = vector.broadcast %cst_5 : f32 to vector<16x32xf32>
    %14 = arith.select %12, %6, %13 : vector<16x32xi1>, vector<16x32xf32>
    %cst_6 = arith.constant dense<0.000000e+00> : vector<32xf32>
    %15 = vector.multi_reduction <add>, %14, %cst_6 [0] : vector<16x32xf32> to vector<32xf32>
    %16 = vector.shape_cast %15 : vector<32xf32> to vector<1x32xf32>
    %17 = arith.divf %16, %8 : vector<1x32xf32>
    %18 = vector.shape_cast %17 : vector<1x32xf32> to vector<1x1x32xf32>
    %cst_7 = arith.constant dense<0.000000e+00> : vector<1xf32>
    %19 = vector.multi_reduction <add>, %18, %cst_7 [1, 2] : vector<1x1x32xf32> to vector<1xf32>
    %20 = vector.shape_cast %19 : vector<1xf32> to vector<1x1x1xf32>
    %21 = vector.extract %20[0, 0, 0] : f32 from vector<1x1x1xf32>
    %22 = arith.extui %12 : vector<16x32xi1> to vector<16x32xi32>
    %23 = arith.sitofp %22 : vector<16x32xi32> to vector<16x32xf32>
    %24 = vector.shape_cast %23 : vector<16x32xf32> to vector<1x16x32xf32>
    %cst_8 = arith.constant dense<0.000000e+00> : vector<1xf32>
    %25 = vector.multi_reduction <add>, %24, %cst_8 [1, 2] : vector<1x16x32xf32> to vector<1xf32>
    %26 = vector.shape_cast %25 : vector<1xf32> to vector<1x1x1xf32>
    %27 = vector.extract %26[0, 0, 0] : f32 from vector<1x1x1xf32>
    %c0_i32 = arith.constant 0 : i32
    %28 = arith.cmpi eq, %arg1, %c0_i32 : i32
    %29 = arith.extui %28 : i1 to i32
    %c0_i32_9 = arith.constant 0 : i32
    %30 = arith.cmpi ne, %29, %c0_i32_9 : i32
    scf.if %30 {
      %cst_23 = arith.constant 0.000000e+00 : f32
      %50 = vector.broadcast %cst_23 : f32 to vector<1x1xf32>
      %c0_24 = arith.constant 0 : index
      %c0_25 = arith.constant 0 : index
      %51 = vector.load %arg5[%c0_24, %c0_25] : memref<1x1xf32, #tpu.memory_space<vmem>>, vector<1x1xf32>
      tpu.vector_store %arg5[%c0_24, %c0_25], %50 {strides = array<i32>} : memref<1x1xf32, #tpu.memory_space<vmem>>, vector<1x1xf32>,
      %cst_26 = arith.constant 0.000000e+00 : f32
      %52 = vector.broadcast %cst_26 : f32 to vector<1x1xf32>
      %c0_27 = arith.constant 0 : index
      %c0_28 = arith.constant 0 : index
      %53 = vector.load %arg6[%c0_27, %c0_28] : memref<1x1xf32, #tpu.memory_space<vmem>>, vector<1x1xf32>
      tpu.vector_store %arg6[%c0_27, %c0_28], %52 {strides = array<i32>} : memref<1x1xf32, #tpu.memory_space<vmem>>, vector<1x1xf32>,
    } else {
    }
    %c0_10 = arith.constant 0 : index
    %c0_11 = arith.constant 0 : index
    %31 = vector.load %arg5[%c0_10, %c0_11] : memref<1x1xf32, #tpu.memory_space<vmem>>, vector<1x1xf32>
    %32 = vector.broadcast %21 : f32 to vector<1x1xf32>
    %33 = arith.addf %31, %32 : vector<1x1xf32>
    %c0_12 = arith.constant 0 : index
    %c0_13 = arith.constant 0 : index
    %34 = vector.load %arg5[%c0_12, %c0_13] : memref<1x1xf32, #tpu.memory_space<vmem>>, vector<1x1xf32>
    tpu.vector_store %arg5[%c0_12, %c0_13], %33 {strides = array<i32>} : memref<1x1xf32, #tpu.memory_space<vmem>>, vector<1x1xf32>,
    %c0_14 = arith.constant 0 : index
    %c0_15 = arith.constant 0 : index
    %35 = vector.load %arg6[%c0_14, %c0_15] : memref<1x1xf32, #tpu.memory_space<vmem>>, vector<1x1xf32>
    %36 = vector.broadcast %27 : f32 to vector<1x1xf32>
    %37 = arith.addf %35, %36 : vector<1x1xf32>
    %c0_16 = arith.constant 0 : index
    %c0_17 = arith.constant 0 : index
    %38 = vector.load %arg6[%c0_16, %c0_17] : memref<1x1xf32, #tpu.memory_space<vmem>>, vector<1x1xf32>
    tpu.vector_store %arg6[%c0_16, %c0_17], %37 {strides = array<i32>} : memref<1x1xf32, #tpu.memory_space<vmem>>, vector<1x1xf32>,
    %c0_i32_18 = arith.constant 0 : i32
    %39 = arith.cmpi eq, %arg1, %c0_i32_18 : i32
    %c0_i32_19 = arith.constant 0 : i32
    %40 = arith.cmpi eq, %arg0, %c0_i32_19 : i32
    %41 = arith.andi %39, %40 : i1
    %42 = arith.extui %41 : i1 to i32
    %c0_i32_20 = arith.constant 0 : i32
    %43 = arith.cmpi ne, %42, %c0_i32_20 : i32
    scf.if %43 {
      %cst_23 = arith.constant 0.000000e+00 : f32
      %50 = vector.broadcast %cst_23 : f32 to vector<1x1xf32>
      %c0_24 = arith.constant 0 : index
      %c0_25 = arith.constant 0 : index
      %51 = vector.load %arg4[%c0_24, %c0_25] : memref<1x1xf32, #tpu.memory_space<vmem>>, vector<1x1xf32>
      tpu.vector_store %arg4[%c0_24, %c0_25], %50 {strides = array<i32>} : memref<1x1xf32, #tpu.memory_space<vmem>>, vector<1x1xf32>,
    } else {
    }
    %44 = arith.extui %39 : i1 to i32
    %c0_i32_21 = arith.constant 0 : i32
    %45 = arith.cmpi ne, %44, %c0_i32_21 : i32
    scf.if %45 {
      %c0_23 = arith.constant 0 : index
      %c0_24 = arith.constant 0 : index
      %50 = vector.load %arg5[%c0_23, %c0_24] : memref<1x1xf32, #tpu.memory_space<vmem>>, vector<1x1xf32>
      %c0_25 = arith.constant 0 : index
      %c0_26 = arith.constant 0 : index
      %51 = vector.load %arg6[%c0_25, %c0_26] : memref<1x1xf32, #tpu.memory_space<vmem>>, vector<1x1xf32>
      %cst_27 = arith.constant 3.200000e+01 : f32
      %52 = vector.broadcast %cst_27 : f32 to vector<1x1xf32>
      %53 = arith.addf %52, %51 : vector<1x1xf32>
      %cst_28 = arith.constant 2.000000e+00 : f32
      %54 = vector.broadcast %cst_28 : f32 to vector<1x1xf32>
      %55 = arith.mulf %54, %50 : vector<1x1xf32>
      %cst_29 = arith.constant 9.99999997E-7 : f32
      %56 = vector.broadcast %cst_29 : f32 to vector<1x1xf32>
      %57 = arith.addf %55, %56 : vector<1x1xf32>
      %cst_30 = arith.constant 9.99999997E-7 : f32
      %58 = vector.broadcast %cst_30 : f32 to vector<1x1xf32>
      %59 = arith.addf %53, %58 : vector<1x1xf32>
      %60 = arith.divf %57, %59 : vector<1x1xf32>
      %cst_31 = arith.constant 1.000000e+00 : f32
      %61 = vector.broadcast %cst_31 : f32 to vector<1x1xf32>
      %62 = arith.subf %61, %60 : vector<1x1xf32>
      %c0_32 = arith.constant 0 : index
      %c0_33 = arith.constant 0 : index
      %63 = vector.load %arg4[%c0_32, %c0_33] : memref<1x1xf32, #tpu.memory_space<vmem>>, vector<1x1xf32>
      %64 = arith.addf %63, %62 : vector<1x1xf32>
      %c0_34 = arith.constant 0 : index
      %c0_35 = arith.constant 0 : index
      %65 = vector.load %arg4[%c0_34, %c0_35] : memref<1x1xf32, #tpu.memory_space<vmem>>, vector<1x1xf32>
      tpu.vector_store %arg4[%c0_34, %c0_35], %64 {strides = array<i32>} : memref<1x1xf32, #tpu.memory_space<vmem>>, vector<1x1xf32>,
    } else {
    }
    %c3_i32 = arith.constant 3 : i32
    %46 = arith.cmpi eq, %arg0, %c3_i32 : i32
    %47 = arith.andi %39, %46 : i1
    %48 = arith.extui %47 : i1 to i32
    %c0_i32_22 = arith.constant 0 : i32
    %49 = arith.cmpi ne, %48, %c0_i32_22 : i32
    scf.if %49 {
      %c0_23 = arith.constant 0 : index
      %c0_24 = arith.constant 0 : index
      %50 = vector.load %arg4[%c0_23, %c0_24] : memref<1x1xf32, #tpu.memory_space<vmem>>, vector<1x1xf32>
      %cst_25 = arith.constant 4.000000e+00 : f32
      %51 = vector.broadcast %cst_25 : f32 to vector<1x1xf32>
      %52 = arith.divf %50, %51 : vector<1x1xf32>
      %c0_26 = arith.constant 0 : index
      %c0_27 = arith.constant 0 : index
      %53 = vector.load %arg4[%c0_26, %c0_27] : memref<1x1xf32, #tpu.memory_space<vmem>>, vector<1x1xf32>
      tpu.vector_store %arg4[%c0_26, %c0_27], %52 {strides = array<i32>} : memref<1x1xf32, #tpu.memory_space<vmem>>, vector<1x1xf32>,
    } else {
    }
    return
  }
  func.func @transform_0(%arg0: i32, %arg1: i32) -> (i32, i32, i32) {
    %c0_i32 = arith.constant 0 : i32
    %c0_i32_0 = arith.constant 0 : i32
    return %arg0, %c0_i32, %arg1 : i32, i32, i32
  }
  func.func @transform_1(%arg0: i32, %arg1: i32) -> (i32, i32) {
    %c0_i32 = arith.constant 0 : i32
    %c0_i32_0 = arith.constant 0 : i32
    return %c0_i32, %arg1 : i32, i32
  }
  func.func @transform_2(%arg0: i32, %arg1: i32) -> (i32, i32) {
    %c0_i32 = arith.constant 0 : i32
    %c0_i32_0 = arith.constant 0 : i32
    %c0_i32_1 = arith.constant 0 : i32
    return %c0_i32, %c0_i32_0 : i32, i32
  }
}

</mosaic_0001>

<llo_original>
// kernel: tpu_custom_call.1
$region0: #{tpu_custom_call.1}
  #allocation0 [shape = 'u32[]', space=smem, size = 0x4, offset = 0x4, fixed_abs, tag = 'smem constant byte address 0x4 - core index']
  #allocation1 [shape = 'u32[144,128]{1,0:T(1,128)}', space=vmem, size = 0x12000, scoped, tag = 'internal scratch']
  #allocation2 [shape = 'f32[1,1]{1,0:T(1,128)}', space=vmem, size = 0x200, scoped, tag = 'scratch operand']
  #allocation3 [shape = 'f32[1,1]{1,0:T(1,128)}', space=vmem, size = 0x200, scoped, tag = 'scratch operand']
  %s0 = inlined_call_operand.hbm [shape: f32[4,16,32], index: 0, kind: input, shape index: {}]
  %s1 = inlined_call_operand.hbm [shape: s8[16,32], index: 1, kind: input, shape index: {}]
  %s2 = inlined_call_operand.hbm [shape: f32[1,1], index: 2, kind: output, shape index: {}]
  %s3 = sld [smem:[#allocation0]]
  $region65: #{tpu_custom_call.1} parent=0
    _
  %s5 = ssub.s32 1, %s3
  %s6 = scalar_select 0, %s5, %s3
  $region1: #{tpu_custom_call.1} parent=0
    #allocation4 [shape = 'u8[16384]{0}', space=vmem, size = 0x4000, scoped, tag = 'input window, operand 0']
    #allocation5 [shape = 's32[2]{0}', space=sflag, size = 0x8, scoped, tag = 'scoped memory for tpu_custom_call.1']
    #allocation6 [shape = 's32[2]{0}', space=sflag, size = 0x8, scoped, tag = 'scoped memory for tpu_custom_call.1']
    #allocation7 [shape = 'u8[2048]{0}', space=vmem, size = 0x800, scoped, tag = 'input window, operand 1, single buffered']
    #allocation8 [shape = 's32[1]{0}', space=sflag, size = 0x4, scoped, tag = 'scoped memory for tpu_custom_call.1']
    #allocation9 [shape = 'u8[512]{0}', space=vmem, size = 0x400, scoped, tag = 'output window, operand 0, single buffered']
    %7 = vsyncpa [#allocation5], 0
    %s8 = scalar_lea.sflag [#allocation5], 1
    %9 = vsyncpa %s8, 0
    %10 = vsyncpa [#allocation8], 0
    %11 = vsyncpa [#allocation6], 0
    loop: start=0, step=1, limit=6
    $region2: #{tpu_custom_call.1} parent=1 // loop_pre_header
      _
    $region3: #{tpu_custom_call.1} parent=1 // loop_header
      %s13 = sphi 0, %s17
      %p14 = scmp.ge.s32.totalorder %s13, 6
      %s20 = sphi 0, %s32
      %s21 = sphi 0, %s28
      %s22 = sphi 0, %s20
      %s23 = sphi 0, %s21
      %s24 = sphi 0, %s22
      %s25 = sphi 0, %s23
      %s37 = sphi 0, %s39
      %s40 = sphi 0, %s37
      %s41 = sphi 0, %s40
      %s57 = sphi 0, %s41
      %s63 = sphi 0, %s65
      %s66 = sphi 0, %s63
      %s67 = sphi 0, %s66
      %s83 = sphi 0, %s67
      %s87 = sphi 0, %s87
      %s89 = sphi 0, %s87
      %s90 = sphi 0, %s89
      %s104 = sphi 0, %s90
    $region4: #{tpu_custom_call.1} parent=1 // loop_header_branch
      %16 = sbr.rel (%p14) target = $region8
    $region5: #{tpu_custom_call.1} parent=1 // loop_body
      %s18 = ssub.s32 %s13, 1
      %s19 = ssub.s32 %s13, 2
      %s26 = sadd.s32 1, %s21
      %p27 = scmp.ge.s32.totalorder %s26, 1
      %s28 = scalar_select %p27, 0, %s26
      %s29 = sadd.s32 1, %s20
      %s30 = scalar_select %p27, %s29, %s20
      %p31 = scmp.ge.s32.totalorder %s30, 4
      %s32 = scalar_select %p31, 0, %s30
      %s33 = ssub.s32 %s20, %s32
      %s34 = ssub.s32 %s21, %s28
      %s35 = sor.u32 %s33, %s34
      %p36 = scmp.eq.s32.totalorder %s35, 0
      %s38 = sadd.s32 %s37, 1
      %s39 = scalar_select %p36, %s37, %s38
      %p42 = pneg %p36
      %p43 = scmp.eq.s32.totalorder %s13, 3
      %p44 = por %p42, %p43
      %p45 = scmp.ne.s32.totalorder %s37, %s40
      %p46 = scmp.eq.s32.totalorder %s13, 0
      %p47 = por %p45, %p46
      %p48 = scmp.ne.s32.totalorder %s37, %s40
      %p49 = scmp.eq.s32.totalorder %s18, 3
      %p50 = por %p48, %p49
      %p51 = scmp.ne.s32.totalorder %s40, %s41
      %p52 = scmp.eq.s32.totalorder %s18, 0
      %p53 = por %p51, %p52
      %p54 = scmp.ne.s32.totalorder %s40, %s41
      %p55 = scmp.eq.s32.totalorder %s19, 3
      %p56 = por %p54, %p55
      %p58 = scmp.ne.s32.totalorder %s41, %s57
      %p59 = scmp.eq.s32.totalorder %s19, 0
      %p60 = por %p58, %p59
      %s61 = ssub.s32 %s21, %s28
      %p62 = scmp.eq.s32.totalorder %s61, 0
      %s64 = sadd.s32 %s63, 1
      %s65 = scalar_select %p62, %s63, %s64
      %p68 = pneg %p62
      %p69 = scmp.eq.s32.totalorder %s13, 3
      %p70 = por %p68, %p69
      %p71 = scmp.ne.s32.totalorder %s63, %s66
      %p72 = scmp.eq.s32.totalorder %s13, 0
      %p73 = por %p71, %p72
      %p74 = scmp.ne.s32.totalorder %s63, %s66
      %p75 = scmp.eq.s32.totalorder %s18, 3
      %p76 = por %p74, %p75
      %p77 = scmp.ne.s32.totalorder %s66, %s67
      %p78 = scmp.eq.s32.totalorder %s18, 0
      %p79 = por %p77, %p78
      %p80 = scmp.ne.s32.totalorder %s66, %s67
      %p81 = scmp.eq.s32.totalorder %s19, 3
      %p82 = por %p80, %p81
      %p84 = scmp.ne.s32.totalorder %s67, %s83
      %p85 = scmp.eq.s32.totalorder %s19, 0
      %p86 = por %p84, %p85
      %s88 = sadd.s32 %s87, 1
      %p91 = scmp.eq.s32.totalorder %s13, 3
      %p92 = scmp.ne.s32.totalorder %s87, %s89
      %p93 = scmp.eq.s32.totalorder %s13, 0
      %p94 = por %p92, %p93
      %p95 = scmp.ne.s32.totalorder %s87, %s89
      %p96 = scmp.eq.s32.totalorder %s18, 3
      %p97 = por %p95, %p96
      %p98 = scmp.ne.s32.totalorder %s89, %s90
      %p99 = scmp.eq.s32.totalorder %s18, 0
      %p100 = por %p98, %p99
      %p101 = scmp.ne.s32.totalorder %s89, %s90
      %p102 = scmp.eq.s32.totalorder %s19, 3
      %p103 = por %p101, %p102
      %p105 = scmp.ne.s32.totalorder %s90, %s104
      %p106 = scmp.eq.s32.totalorder %s19, 0
      %p107 = por %p105, %p106
      %p108 = scmp.le.s32.totalorder 1, %s13
      %p109 = scmp.lt.s32.totalorder %s13, 5
      %p110 = pnand %p108, %p109
      %p111 = pneg %p110
      // Predicated region
      $region9: #{tpu_custom_call.1} parent=5 // pred_check
        _
      $region10: #{tpu_custom_call.1} parent=5 // pred_check_branch
        %113 = sbr.rel (%p110) target = $region12
      $region11: #{tpu_custom_call.1} parent=5 // pred_region
        %s114 = ssub.s32 %s13, 1
        // Predicated region
        $region13: #{tpu_custom_call.1} parent=11 // pred_check
          %p115 = pneg %p79
        $region14: #{tpu_custom_call.1} parent=11 // pred_check_branch
          %117 = sbr.rel (%p115) target = $region16
        $region15: #{tpu_custom_call.1} parent=11 // pred_region
          %s119 = ssub.s32 64, 64
          %120 = vsyncadd [#allocation8], %s119
          %s121 = smul.addr %s23, 32
          %s122 = scalar_lea.hbm %s1, %s121
          %s123 = sshll.u32 [#allocation7], 4
          %s124 = int_to_ptr.vmem [resolvable:$true] %s123
          %129 = dma.hbm_to_vmem [thread:$0]  %s122, 64, %s124, [#allocation8], 32, 32, 2
        $region16: #{tpu_custom_call.1} parent=11 // pred_fallthru
          _
      $region12: #{tpu_custom_call.1} parent=5 // pred_fallthru
        _
      %p130 = scmp.lt.s32.totalorder %s13, 4
      // Predicated region
      $region17: #{tpu_custom_call.1} parent=5 // pred_check
        %p131 = pneg %p130
      $region18: #{tpu_custom_call.1} parent=5 // pred_check_branch
        %133 = sbr.rel (%p131) target = $region20
      $region19: #{tpu_custom_call.1} parent=5 // pred_region
        // Predicated region
        $region21: #{tpu_custom_call.1} parent=19 // pred_check
          %p134 = pneg %p47
        $region22: #{tpu_custom_call.1} parent=19 // pred_check_branch
          %136 = sbr.rel (%p134) target = $region24
        $region23: #{tpu_custom_call.1} parent=19 // pred_region
          %s137 = sand.u32 %s37, 1
          %s138 = scalar_lea.sflag [#allocation5], %s137
          %s139 = sand.u32 %s37, 1
          %s140 = smul.addr %s139, 16
          %s141 = scalar_lea.vmem [#allocation4], %s140
          %s143 = ssub.s32 256, 256
          %144 = vsyncadd %s138, %s143
          %s145 = smul.addr %s20, 2
          %s146 = sadd.s32 %s21, %s145
          %s147 = smul.addr %s146, 128
          %s148 = scalar_lea.hbm %s0, %s147
          %s149 = sshll.u32 %s141, 4
          %s150 = int_to_ptr.vmem [resolvable:$true] %s149
          %155 = dma.hbm_to_vmem [thread:$0]  %s148, 256, %s150, %s138, 128, 128, 8
        $region24: #{tpu_custom_call.1} parent=19 // pred_fallthru
          _
      $region20: #{tpu_custom_call.1} parent=5 // pred_fallthru
        _
      %p156 = scmp.le.s32.totalorder 1, %s13
      %p157 = scmp.lt.s32.totalorder %s13, 5
      %p158 = pnand %p156, %p157
      %p159 = pneg %p158
      // Predicated region
      $region25: #{tpu_custom_call.1} parent=5 // pred_check
        _
      $region26: #{tpu_custom_call.1} parent=5 // pred_check_branch
        %161 = sbr.rel (%p158) target = $region28
      $region27: #{tpu_custom_call.1} parent=5 // pred_region
        %s162 = ssub.s32 %s13, 1
        %s163 = sand.u32 %s40, 1
        %s164 = scalar_lea.sflag [#allocation5], %s163
        %s165 = sand.u32 %s40, 1
        %s166 = smul.addr %s165, 16
        %s167 = scalar_lea.vmem [#allocation4], %s166
        // Predicated region
        $region29: #{tpu_custom_call.1} parent=27 // pred_check
          %p168 = pneg %p53
        $region30: #{tpu_custom_call.1} parent=27 // pred_check_branch
          %170 = sbr.rel (%p168) target = $region32
        $region31: #{tpu_custom_call.1} parent=27 // pred_region
          %171 = dma.done %s164, 256
        $region32: #{tpu_custom_call.1} parent=27 // pred_fallthru
          _
        // Predicated region
        $region33: #{tpu_custom_call.1} parent=27 // pred_check
          %p172 = pneg %p79
        $region34: #{tpu_custom_call.1} parent=27 // pred_check_branch
          %174 = sbr.rel (%p172) target = $region36
        $region35: #{tpu_custom_call.1} parent=27 // pred_region
          %175 = dma.done [#allocation8], 64
        $region36: #{tpu_custom_call.1} parent=27 // pred_fallthru
          _
        %s176 = sand.u32 %s40, 1
        %s177 = scalar_lea.sflag [#allocation5], %s176
        %s178 = sand.u32 %s40, 1
        %s179 = smul.addr %s178, 16
        %s180 = scalar_lea.vmem [#allocation4], %s179
        %p181 = pneg %p53
        %p182 = pneg %p50
        %p183 = pneg %p79
        %p184 = pneg %p76
        %p185 = pneg %p100
        %p186 = pneg %p97
        %v187 = vld [vmem:[%s167] sm:$0xff]
        %v188 = vld [vmem:[%s167 + $0x8] sm:$0xff]
        %vm189 = vcmask 261120
        %v190 = vsel %vm189, %v187, -inf
        %v191 = vsel %vm189, %v188, -inf
        %v192 = vmax.f32 %v190, %v191
        %v193 = vrot.slane %v192, 4
        %v194 = vmax.f32 %v192, %v193
        %v195 = vrot.slane %v194, 2
        %v196 = vmax.f32 %v194, %v195
        %v197 = vrot.slane %v196, 1
        %v198 = vmax.f32 %v196, %v197
        %v199 = vsub.f32 %v187, %v198
        %v200 = vsub.f32 %v188, %v198
        %v201 = vmul.f32 %v199, 1.442695
        %v202 = vpow.pop %v201
        %v203 = vmul.f32 %v200, 1.442695
        %v204 = vpow.pop %v203
        %v205 = vsel %vm189, %v202, 0.0
        %v206 = vsel %vm189, %v204, 0.0
        %v207 = vadd.f32 %v205, %v206
        %v208 = vrot.slane %v207, 4
        %v209 = vadd.f32 %v207, %v208
        %v210 = vrot.slane %v209, 2
        %v211 = vadd.f32 %v209, %v210
        %v212 = vrot.slane %v211, 1
        %v213 = vadd.f32 %v211, %v212
        %v214 = vld [vmem:[#allocation7] sm:$0x3]
        %v215 = vld [vmem:[#allocation7 + $0x2] sm:$0x3]
        %v216 = vunpack.c.0.s8 %v214
        %v217 = vunpack.c.0.s8 %v215
        %v218 = vstv %s22
        %vm219 = vcmp.eq.s32.totalorder %v216, %v218
        %vm220 = vcmp.eq.s32.totalorder %v217, %v218
        %v221 = vsel %vm219, %v202, 0.0
        %v222 = vsel %vm220, %v204, 0.0
        %v223 = vsel %vm189, %v221, 0.0
        %v224 = vsel %vm189, %v222, 0.0
        %v225 = vadd.f32 %v223, %v224
        %v226 = vrot.slane %v225, 4
        %v227 = vadd.f32 %v225, %v226
        %v228 = vrot.slane %v227, 2
        %v229 = vadd.f32 %v227, %v228
        %v230 = vrot.slane %v229, 1
        %v231 = vadd.f32 %v229, %v230
        %v232 = vrcp.pop %v213
        %v233 = vmul.f32 %v231, %v232
        %vm234 = vcmask 253952
        %v235 = vsel %vm234, %v233, 0.0
        %236 = vadd.xlane.f32.xlu0 %v235
        %v237 = vpop.xlane.xlu0 %236
        %v238 = vrot.slane %v237, 4
        %v239 = vadd.f32 %v237, %v238
        %v240 = vrot.slane %v239, 2
        %v241 = vadd.f32 %v239, %v240
        %v242 = vrot.slane %v241, 1
        %v243 = vadd.f32 %v241, %v242
        %s244 = vtos %v243
        %v245 = vsel %vm219, 1, 0
        %v246 = vsel %vm220, 1, 0
        %v247 = vcvt.s32.f32 %v245
        %v248 = vcvt.s32.f32 %v246
        %v249 = vsel %vm189, %v247, 0.0
        %v250 = vsel %vm189, %v248, 0.0
        %v251 = vadd.f32 %v249, %v250
        %252 = vadd.xlane.f32.xlu0 %v251
        %v253 = vpop.xlane.xlu0 %252
        %v254 = vrot.slane %v253, 4
        %v255 = vadd.f32 %v253, %v254
        %v256 = vrot.slane %v255, 2
        %v257 = vadd.f32 %v255, %v256
        %v258 = vrot.slane %v257, 1
        %v259 = vadd.f32 %v257, %v258
        %s260 = vtos %v259
        %p261 = scmp.eq.s32.totalorder %s23, 0
        // Predicated region
        $region37: #{tpu_custom_call.1} parent=27 // pred_check
          %p262 = pneg %p261
        $region38: #{tpu_custom_call.1} parent=27 // pred_check_branch
          %264 = sbr.rel (%p262) target = $region40
        $region39: #{tpu_custom_call.1} parent=27 // pred_region
          %vm265 = vcmask 0
          %266 = vst.msk [vmem:[#allocation2] sm:$0x1] %vm265, 0.0
          %267 = vst.msk [vmem:[#allocation3] sm:$0x1] %vm265, 0.0
        $region40: #{tpu_custom_call.1} parent=27 // pred_fallthru
          _
        %v268 = vld [vmem:[#allocation2] sm:$0x1]
        %v269 = vstv %s244
        %v270 = vadd.f32 %v268, %v269
        %vm271 = vcmask 0
        %272 = vst.msk [vmem:[#allocation2] sm:$0x1] %vm271, %v270
        %v273 = vld [vmem:[#allocation3] sm:$0x1]
        %v274 = vstv %s260
        %v275 = vadd.f32 %v273, %v274
        %276 = vst.msk [vmem:[#allocation3] sm:$0x1] %vm271, %v275
        %p277 = scmp.eq.s32.totalorder %s22, 0
        %p278 = pnand %p261, %p277
        %p279 = pneg %p278
        // Predicated region
        $region41: #{tpu_custom_call.1} parent=27 // pred_check
          _
        $region42: #{tpu_custom_call.1} parent=27 // pred_check_branch
          %281 = sbr.rel (%p278) target = $region44
        $region43: #{tpu_custom_call.1} parent=27 // pred_region
          %282 = vst.msk [vmem:[#allocation9] sm:$0x1] %vm271, 0.0
        $region44: #{tpu_custom_call.1} parent=27 // pred_fallthru
          _
        // Predicated region
        $region45: #{tpu_custom_call.1} parent=27 // pred_check
          %p283 = pneg %p261
        $region46: #{tpu_custom_call.1} parent=27 // pred_check_branch
          %285 = sbr.rel (%p283) target = $region48
        $region47: #{tpu_custom_call.1} parent=27 // pred_region
          %v286 = vld [vmem:[#allocation2] sm:$0x1]
          %v287 = vld [vmem:[#allocation3] sm:$0x1]
          %v288 = vadd.f32 %v287, 32.0
          %v289 = vmul.f32 %v286, 2.0
          %v290 = vadd.f32 %v289, 1e-06
          %v291 = vadd.f32 %v288, 1e-06
          %v292 = vrcp.pop %v291
          %v293 = vmul.f32 %v290, %v292
          %v294 = vsub.f32 1.0, %v293
          %v295 = vld [vmem:[#allocation9] sm:$0x1]
          %v296 = vadd.f32 %v295, %v294
          %297 = vst.msk [vmem:[#allocation9] sm:$0x1] %vm271, %v296
        $region48: #{tpu_custom_call.1} parent=27 // pred_fallthru
          _
        %p298 = scmp.eq.s32.totalorder %s22, 3
        %p299 = pnand %p261, %p298
        %p300 = pneg %p299
        // Predicated region
        $region49: #{tpu_custom_call.1} parent=27 // pred_check
          _
        $region50: #{tpu_custom_call.1} parent=27 // pred_check_branch
          %302 = sbr.rel (%p299) target = $region52
        $region51: #{tpu_custom_call.1} parent=27 // pred_region
          %v303 = vld [vmem:[#allocation9] sm:$0x1]
          %v304 = vrcp.pop 4.0
          %v305 = vmul.f32 %v303, %v304
          %306 = vst.msk [vmem:[#allocation9] sm:$0x1] %vm271, %v305
        $region52: #{tpu_custom_call.1} parent=27 // pred_fallthru
          _
        // Predicated region
        $region53: #{tpu_custom_call.1} parent=27 // pred_check
          %p307 = pneg %p97
        $region54: #{tpu_custom_call.1} parent=27 // pred_check_branch
          %309 = sbr.rel (%p307) target = $region56
        $region55: #{tpu_custom_call.1} parent=27 // pred_region
          %s311 = ssub.s32 16, 16
          %312 = vsyncadd [#allocation6], %s311
          %s314 = sshll.u32 [#allocation9], 4
          %s315 = int_to_ptr.vmem [resolvable:$true] %s314
          %317 = dma.vmem_to_hbm [thread:$0]  %s315, 16, %s2, [#allocation6]
        $region56: #{tpu_custom_call.1} parent=27 // pred_fallthru
          _
        // Predicated region
        $region57: #{tpu_custom_call.1} parent=27 // pred_check
          %p318 = pneg %p97
        $region58: #{tpu_custom_call.1} parent=27 // pred_check_branch
          %320 = sbr.rel (%p318) target = $region60
        $region59: #{tpu_custom_call.1} parent=27 // pred_region
          %321 = dma.done [#allocation6], 16
        $region60: #{tpu_custom_call.1} parent=27 // pred_fallthru
          _
      $region28: #{tpu_custom_call.1} parent=5 // pred_fallthru
        _
      %p322 = scmp.le.s32.totalorder 2, %s13
      // Predicated region
      $region61: #{tpu_custom_call.1} parent=5 // pred_check
        %p323 = pneg %p322
      $region62: #{tpu_custom_call.1} parent=5 // pred_check_branch
        %325 = sbr.rel (%p323) target = $region64
      $region63: #{tpu_custom_call.1} parent=5 // pred_region
        %s326 = ssub.s32 %s13, 2
      $region64: #{tpu_custom_call.1} parent=5 // pred_fallthru
        _
    $region6: #{tpu_custom_call.1} parent=1 // loop_footer
      %s17 = sadd.s32 1, %s13
    $region7: #{tpu_custom_call.1} parent=1 // loop_footer_branch
      %12 = sbr.rel target = $region3
    $region8: #{tpu_custom_call.1} parent=1 // loop_exit
      _
    %327 = vsyncpa [#allocation5], 1
    %s328 = scalar_lea.sflag [#allocation5], 1
    %329 = vsyncpa %s328, 1
    %330 = vsyncpa [#allocation8], 1
    %331 = vsyncpa [#allocation6], 1
    %s332 = scalar_lea.sflag [#allocation6], 1
    %333 = vsyncpa %s332, 1

</llo_original>
